<compile_context>
chip_gen: v7x
topology: tpu7x:2x2x1
jax: 0.10.0
libtpu: 0.0.40
codegen_flags: <defaults>
</compile_context>

<pallas_src>
import math

import jax
import jax.numpy as jnp
from jax.experimental import pallas as pl
from jax.experimental.pallas import tpu as pltpu


def _round_up(n, m):
    return ((n + m - 1) // m) * m


def _gfp_kernel(x_ref, w_ref, phase_ref, out_ref):
    # x_ref    : (TB, k)   packed batch rows (k logical rows per physical row)
    # w_ref    : (k, L)    row j = 2*pi*[W|W] in lane block j, zeros elsewhere
    # phase_ref: (1, L)    0 in sin lanes, pi/2 in cos lanes (cos(t)=sin(t+pi/2))
    # out_ref  : (TB, L)   L is a multiple of 128 -> unmasked lane-dense store
    x = x_ref[...]
    w = w_ref[...]
    k = x.shape[1]
    # Full-width broadcast multiplies against lane-masked W copies; each lane
    # gets a nonzero contribution from exactly one packed column.
    proj = x[:, 0:1] * w[0:1, :]
    for j in range(1, k):                      # k is a small static int (unrolled)
        proj = proj + x[:, j:j + 1] * w[j:j + 1, :]
    proj = proj + phase_ref[...]
    # Single full-128-lane sin per output vreg (the pi/2 phase adds one extra
    # f32 rounding in the cos lanes -- well within tolerance).
    out_ref[...] = jnp.sin(proj).astype(out_ref.dtype)


def gaussian_fourier_projection(x, W, *, tile_rows=1024, out_dtype=jnp.float32):
    """x: (B,) float, W: (half,) float -> (B, 2*half) in out_dtype."""
    B = x.shape[0]
    half = W.shape[0]
    embed_dim = 2 * half

    # Fold the fixed 2*pi scale into the (frozen) parameter once.
    w_scaled = W.astype(jnp.float32) * (2.0 * math.pi)

    # ---- lane-dense output geometry -------------------------------------
    if embed_dim < 128 and 128 % embed_dim == 0:
        block = embed_dim                 # per-logical-row width inside a packed row
        k = 128 // embed_dim              # logical rows packed per physical row
    else:
        block = _round_up(embed_dim, 128)  # pad ragged rows to a lane multiple
        k = 1
    L = k * block                         # packed output lane width (multiple of 128)
    lane_pad = block - embed_dim

    # Per-logical-row constants: tiled W and the sin/cos phase.
    w_row = jnp.concatenate(
        [w_scaled, w_scaled, jnp.zeros((lane_pad,), jnp.float32)])
    phase_row = jnp.concatenate(
        [jnp.zeros((half,), jnp.float32),
         jnp.full((half,), 0.5 * math.pi, jnp.float32),
         jnp.zeros((lane_pad,), jnp.float32)])
    # Lane-masked per-column copies of w_row: row j nonzero only in block j.
    w_masked = jnp.kron(jnp.eye(k, dtype=jnp.float32), w_row[None, :])  # (k, L)
    phase = jnp.tile(phase_row, (k,)).reshape(1, L)

    # ---- tile geometry ----------------------------------------------------
    tile_rows = max(8, _round_up(int(tile_rows), 8))   # keep sublane-aligned
    p_rows = pl.cdiv(B, k)                             # packed rows of real data

    # Aim for ~4 grid steps (output-DMA overlap + v7x megacore sharding) while
    # keeping tiles tall enough (>=256 rows) to stay near the HBM roofline.
    tb = _round_up(pl.cdiv(p_rows, 4), 8)
    if p_rows >= 512:
        tb = max(tb, 256)
    tb = max(8, min(tb, tile_rows))
    num_tiles = pl.cdiv(p_rows, tb)
    if num_tiles < 2 and p_rows > 8:
        # Guarantee >=2 grid steps so both v7x TensorCores get work.
        tb = max(8, _round_up(pl.cdiv(p_rows, 2), 8))
        num_tiles = pl.cdiv(p_rows, tb)
    num_tiles = max(num_tiles, 1)
    p_pad = num_tiles * tb
    b_pad = p_pad * k

    x_f32 = x.astype(jnp.float32)
    if b_pad != B:
        x_f32 = jnp.pad(x_f32, (0, b_pad - B))
    x_packed = x_f32.reshape(p_pad, k)     # x lane-expansion happens in-kernel

    out_itemsize = jnp.dtype(out_dtype).itemsize
    cost = pl.CostEstimate(
        flops=2 * p_pad * L * (k + 1),                 # broadcast mults + adds
        transcendentals=p_pad * L,                     # one sin per output elem
        bytes_accessed=4 * p_pad * k + 4 * (k + 1) * L + p_pad * L * out_itemsize,
    )

    out_packed = pl.pallas_call(
        _gfp_kernel,
        out_shape=jax.ShapeDtypeStruct((p_pad, L), out_dtype),
        grid=(num_tiles,),
        in_specs=[
            pl.BlockSpec((tb, k), lambda i: (i, 0)),
            pl.BlockSpec((k, L), lambda i: (0, 0)),    # constants stay VMEM-resident
            pl.BlockSpec((1, L), lambda i: (0, 0)),
        ],
        out_specs=pl.BlockSpec((tb, L), lambda i: (i, 0)),
        compiler_params=pltpu.CompilerParams(dimension_semantics=("parallel",)),
        cost_estimate=cost,
    )(x_packed, w_masked, phase)

    # Unpack: packed row r, lane block j  ->  logical batch row r*k + j.
    return out_packed.reshape(p_pad * k, block)[:B, :embed_dim]


if __name__ == "__main__":
    key = jax.random.PRNGKey(0)
    k_w, k_x = jax.random.split(key)

    embed_dim = 64
    scale = 30.0
    half = embed_dim // 2
    batch = 8

    # Mirrors torch.randn(embed_dim // 2) * scale (frozen parameter).
    W = jax.random.normal(k_w, (half,), dtype=jnp.float32) * scale
    # Time steps, e.g. uniform in (0, 1).
    x = jax.random.uniform(k_x, (batch,), dtype=jnp.float32)

    out = jax.block_until_ready(gaussian_fourier_projection(x, W))

    # Plain-JAX reference (same math as the torch module).
    x_proj = x[:, None] * W[None, :] * 2.0 * math.pi
    ref = jnp.concatenate([jnp.sin(x_proj), jnp.cos(x_proj)], axis=-1)

    assert out.shape == (batch, embed_dim)
    assert out.dtype == jnp.float32
    assert jnp.allclose(out, ref, atol=2e-3), "mismatch vs reference"

    print("KERNEL_OK")
</pallas_src>

<mosaic_0001>
module attributes {stable_mosaic.version = 11 : i64} {
  func.func @_gfp_kernel(%arg0: i32, %arg1: memref<8x2xf32, #tpu.memory_space<vmem>>, %arg2: memref<2x128xf32, #tpu.memory_space<vmem>>, %arg3: memref<1x128xf32, #tpu.memory_space<vmem>>, %arg4: memref<8x128xf32, #tpu.memory_space<vmem>>) attributes {dimension_semantics = [#tpu.dimension_semantics<parallel>], iteration_bounds = array<i64: 1>, scalar_prefetch = 0 : i64, scratch_operands = 0 : i64, tpu.core_type = #tpu.core_type<tc>, window_params = [{transform_indices = @transform_0, window_bounds = array<i64: 8, 2>}, {pipeline_mode = #tpu.pipeline_mode<synchronous>, transform_indices = @transform_1, window_bounds = array<i64: 2, 128>}, {pipeline_mode = #tpu.pipeline_mode<synchronous>, transform_indices = @transform_2, window_bounds = array<i64: 1, 128>}, {transform_indices = @transform_3, window_bounds = array<i64: 8, 128>}]} {
    %c0 = arith.constant 0 : index
    %c0_0 = arith.constant 0 : index
    %0 = vector.load %arg1[%c0, %c0_0] : memref<8x2xf32, #tpu.memory_space<vmem>>, vector<8x2xf32>
    %c0_1 = arith.constant 0 : index
    %c0_2 = arith.constant 0 : index
    %1 = vector.load %arg2[%c0_1, %c0_2] : memref<2x128xf32, #tpu.memory_space<vmem>>, vector<2x128xf32>
    %2 = vector.extract_strided_slice %0 {offsets = [0, 0], sizes = [8, 1], strides = [1, 1]} : vector<8x2xf32> to vector<8x1xf32>
    %3 = vector.extract_strided_slice %1 {offsets = [0, 0], sizes = [1, 128], strides = [1, 1]} : vector<2x128xf32> to vector<1x128xf32>
    %4 = vector.broadcast %2 : vector<8x1xf32> to vector<8x128xf32>
    %5 = vector.broadcast %3 : vector<1x128xf32> to vector<8x128xf32>
    %6 = arith.mulf %4, %5 : vector<8x128xf32>
    %7 = vector.extract_strided_slice %0 {offsets = [0, 1], sizes = [8, 1], strides = [1, 1]} : vector<8x2xf32> to vector<8x1xf32>
    %8 = vector.extract_strided_slice %1 {offsets = [1, 0], sizes = [1, 128], strides = [1, 1]} : vector<2x128xf32> to vector<1x128xf32>
    %9 = vector.broadcast %7 : vector<8x1xf32> to vector<8x128xf32>
    %10 = vector.broadcast %8 : vector<1x128xf32> to vector<8x128xf32>
    %11 = arith.mulf %9, %10 : vector<8x128xf32>
    %12 = arith.addf %6, %11 : vector<8x128xf32>
    %c0_3 = arith.constant 0 : index
    %c0_4 = arith.constant 0 : index
    %13 = vector.load %arg3[%c0_3, %c0_4] : memref<1x128xf32, #tpu.memory_space<vmem>>, vector<1x128xf32>
    %14 = vector.broadcast %13 : vector<1x128xf32> to vector<8x128xf32>
    %15 = arith.addf %12, %14 : vector<8x128xf32>
    %16 = math.sin %15 : vector<8x128xf32>
    %c0_5 = arith.constant 0 : index
    %c0_6 = arith.constant 0 : index
    %17 = vector.load %arg4[%c0_5, %c0_6] : memref<8x128xf32, #tpu.memory_space<vmem>>, vector<8x128xf32>
    tpu.vector_store %arg4[%c0_5, %c0_6], %16 {strides = array<i32>} : memref<8x128xf32, #tpu.memory_space<vmem>>, vector<8x128xf32>,
    return
  }
  func.func @transform_0(%arg0: i32) -> (i32, i32) {
    %c0_i32 = arith.constant 0 : i32
    %c0_i32_0 = arith.constant 0 : i32
    return %arg0, %c0_i32 : i32, i32
  }
  func.func @transform_1(%arg0: i32) -> (i32, i32) {
    %c0_i32 = arith.constant 0 : i32
    %c0_i32_0 = arith.constant 0 : i32
    %c0_i32_1 = arith.constant 0 : i32
    return %c0_i32, %c0_i32_0 : i32, i32
  }
  func.func @transform_2(%arg0: i32) -> (i32, i32) {
    %c0_i32 = arith.constant 0 : i32
    %c0_i32_0 = arith.constant 0 : i32
    %c0_i32_1 = arith.constant 0 : i32
    return %c0_i32, %c0_i32_0 : i32, i32
  }
  func.func @transform_3(%arg0: i32) -> (i32, i32) {
    %c0_i32 = arith.constant 0 : i32
    %c0_i32_0 = arith.constant 0 : i32
    return %arg0, %c0_i32 : i32, i32
  }
}

</mosaic_0001>

<llo_original>
// kernel: tpu_custom_call.1
$region0: #{tpu_custom_call.1}
  #allocation0 [shape = 'u32[]', space=smem, size = 0x4, offset = 0x4, fixed_abs, tag = 'smem constant byte address 0x4 - core index']
  #allocation1 [shape = 'u32[144,128]{1,0:T(1,128)}', space=vmem, size = 0x12000, scoped, tag = 'internal scratch']
  %s0 = inlined_call_operand.vmem [shape: f32[8,2], index: 0, kind: input, shape index: {}]
  %s1 = inlined_call_operand.vmem [shape: f32[2,128], index: 1, kind: input, shape index: {}]
  %s2 = inlined_call_operand.vmem [shape: f32[1,128], index: 2, kind: input, shape index: {}]
  %s3 = inlined_call_operand.hbm [shape: f32[8,128], index: 3, kind: output, shape index: {}]
  %s4 = sld [smem:[#allocation0]]
  $region22: #{tpu_custom_call.1} parent=0
    _
  %s6 = ssub.s32 1, %s4
  %s7 = scalar_select 0, %s6, %s4
  $region1: #{tpu_custom_call.1} parent=0
    #allocation2 [shape = 'u8[4096]{0}', space=vmem, size = 0x1000, scoped, tag = 'output window, operand 0, single buffered']
    #allocation3 [shape = 's32[1]{0}', space=sflag, size = 0x4, scoped, tag = 'scoped memory for tpu_custom_call.1']
    %8 = vsyncpa [#allocation3], 0
    // Predicated region
    $region2: #{tpu_custom_call.1} parent=1 // pred_check
      _
    $region3: #{tpu_custom_call.1} parent=1 // pred_check_branch
      %10 = sbr.rel (0) target = $region5
    $region4: #{tpu_custom_call.1} parent=1 // pred_region
      _
    $region5: #{tpu_custom_call.1} parent=1 // pred_fallthru
      _
    // Predicated region
    $region6: #{tpu_custom_call.1} parent=1 // pred_check
      _
    $region7: #{tpu_custom_call.1} parent=1 // pred_check_branch
      %12 = sbr.rel (0) target = $region9
    $region8: #{tpu_custom_call.1} parent=1 // pred_region
      _
    $region9: #{tpu_custom_call.1} parent=1 // pred_fallthru
      _
    // Predicated region
    $region10: #{tpu_custom_call.1} parent=1 // pred_check
      _
    $region11: #{tpu_custom_call.1} parent=1 // pred_check_branch
      %14 = sbr.rel (0) target = $region13
    $region12: #{tpu_custom_call.1} parent=1 // pred_region
      _
    $region13: #{tpu_custom_call.1} parent=1 // pred_fallthru
      _
    %v15 = vld [vmem:[%s0] sm:$0xff]
    %v16 = vld [vmem:[%s1] sm:$0x3]
    %18 = vset.pattern.permute.xlu0 0
    %19 = vperm.xlu0 %18, %v15
    %v20 = vpop.permute.xlu0 %19
    %v22 = vlaneseq
    %v23 = vshrl.u32 %v22, 7
    %v24 = vsub.s32 0, %v23
    %v25 = vrot.slane %v16, %v24
    %v26 = vmul.f32 %v20, %v25
    %27 = vset.pattern.permute.xlu0 1
    %28 = vperm.xlu0 %27, %v15
    %v29 = vpop.permute.xlu0 %28
    %v31 = vlaneseq
    %v32 = vshrl.u32 %v31, 7
    %v33 = vsub.s32 1, %v32
    %v34 = vrot.slane %v16, %v33
    %v35 = vmul.f32 %v29, %v34
    %v36 = vadd.f32 %v26, %v35
    %v37 = vld [vmem:[%s2] sm:$0x1]
    %v39 = vlaneseq
    %v40 = vshrl.u32 %v39, 7
    %v41 = vsub.s32 0, %v40
    %v42 = vrot.slane %v37, %v41
    %v44 = vadd.f32 %v36, %v42
    %v45 = vand.u32 2147483647, %v44
    %vm46 = vcmp.le.f32.partialorder %v45, 0.7853982
    %vm47 = vcmp.lt.s32.totalorder %v44, 0
    %v48 = vand.u32 %v44, 2139095040
    %v49 = vshrl.u32 %v48, 23
    %v50 = vsub.s32 %v49, 127
    %v51 = vand.u32 2147483647, %v44
    %v52 = vand.u32 %v51, 8388607
    %v53 = vor.u32 %v52, 8388608
    %v54 = vsub.s32 0, %v53
    %v55 = vadd.s32 %v50, 1
    %vm56 = vcmp.gt.s32.totalorder %v55, 0
    %v57 = vsel %vm56, %v55, 0
    %v58 = vshrl.u32 %v57, 5
    %v59 = vand.u32 %v57, 31
    %v60 = vsub.s32 32, %v59
    %v61 = vshrl.u32 683565275, %v60
    %v62 = vshll.u32 683565275, %v59
    %v63 = vshrl.u32 2475754826, %v60
    %v64 = vor.u32 %v62, %v63
    %v65 = vshll.u32 2475754826, %v59
    %v66 = vshrl.u32 2131351028, %v60
    %v67 = vor.u32 %v65, %v66
    %v68 = vshll.u32 2131351028, %v59
    %v69 = vshrl.u32 2102212464, %v60
    %v70 = vor.u32 %v68, %v69
    %v71 = vshll.u32 2102212464, %v59
    %v72 = vshrl.u32 920167782, %v60
    %v73 = vor.u32 %v71, %v72
    %v74 = vshll.u32 920167782, %v59
    %v75 = vshrl.u32 1326507024, %v60
    %v76 = vor.u32 %v74, %v75
    %vm77 = vcmp.lt.s32.totalorder %v58, 1
    %vm78 = vcmp.lt.s32.totalorder %v58, 2
    %vm79 = vcmp.lt.s32.totalorder %v58, 3
    %vm80 = vcmp.lt.s32.totalorder %v58, 4
    %v81 = vsel %vm77, %v61, %v64
    %v82 = vsel %vm80, %v70, 2102212464
    %v83 = vsel %vm79, %v67, %v82
    %v84 = vsel %vm78, %v81, %v83
    %v85 = vsel %vm77, %v64, %v67
    %v86 = vsel %vm80, %v73, 920167782
    %v87 = vsel %vm79, %v70, %v86
    %v88 = vsel %vm78, %v85, %v87
    %v89 = vsel %vm77, %v67, %v70
    %v90 = vsel %vm80, %v76, 1326507024
    %v91 = vsel %vm79, %v73, %v90
    %v92 = vsel %vm78, %v89, %v91
    %v93 = vshll.u32 %v53, 8
    %v94 = vmul.u32.u64.compose %v93, %v92
    %v95 = vextract.low.u32 %v94
    %v96 = vextract.high.u32 %v94
    %v97 = vmul.u32.u64.compose %v93, %v88
    %v98 = vextract.low.u32 %v97
    %v99 = vextract.high.u32 %v97
    %v100 = vmul.u32 %v93, %v84
    %v101 = vadd.s32 %v96, %v98
    %vm102 = vc.u32 %v96, %v98
    %v103 = vadd.s32 %v99, 1
    %v104 = vsel %vm102, %v103, %v99
    %v105 = vadd.s32 %v100, %v104
    %v106 = vadd.s32 %v105, 536870912
    %v107 = vshrl.u32 %v106, 30
    %v108 = vshll.u32 %v107, 30
    %v109 = vsub.s32 %v105, %v108
    %vm110 = vcmp.lt.s32.totalorder %v109, 0
    %v111 = vsub.s32 0, %v109
    %v112 = vsel %vm110, %v111, %v109
    %v113 = vclz %v112
    %v114 = vsub.s32 %v113, 2
    %vm115 = vcmp.gt.s32.totalorder 0, %v114
    %v116 = vsel %vm115, 0, %v114
    %v117 = vsub.s32 32, %v116
    %v118 = vshll.u32 %v109, %v116
    %v119 = vshrl.u32 %v101, %v117
    %v120 = vor.u32 %v118, %v119
    %v121 = vsub.s32 4294967266, %v116
    %v122 = vadd.s32 %v121, 127
    %v123 = vshll.u32 %v122, 23
    %v124 = vor.u32 4788187, %v123
    %v125 = vand.u32 2147483647, %v124
    %v127 = vcvt.s32.f32 %v120
    %v128 = vmul.f32 %v127, %v125
    %v129 = vxor.u32 %v128, 2147483648
    %v130 = vsel %vm47, %v129, %v128
    %v131 = vsub.s32 4, %v107
    %v132 = vsel %vm47, %v131, %v107
    %v133 = vsel %vm46, %v44, %v130
    %v134 = vsel %vm46, 0, %v132
    %v135 = vcosq.f32.pop %v133
    %v136 = vsinq.f32.pop %v133
    %vm137 = vweird.f32 %v44
    %v138 = vadd.s32 %v134, 3
    %v139 = vand.u32 %v138, 3
    %vm140 = vcmp.lt.s32.totalorder %v139, 2
    %vm141 = vcmp.eq.s32.totalorder %v139, 0
    %v142 = vxor.u32 %v136, 2147483648
    %v143 = vsel %vm141, %v135, %v142
    %vm144 = vcmp.eq.s32.totalorder %v139, 2
    %v145 = vxor.u32 %v135, 2147483648
    %v146 = vsel %vm144, %v145, %v136
    %v147 = vsel %vm140, %v143, %v146
    %v148 = vsel %vm137, nan, %v147
    %149 = vst [vmem:[#allocation2] sm:$0xff] %v148
    // Predicated region
    $region14: #{tpu_custom_call.1} parent=1 // pred_check
      _
    $region15: #{tpu_custom_call.1} parent=1 // pred_check_branch
      %151 = sbr.rel (0) target = $region17
    $region16: #{tpu_custom_call.1} parent=1 // pred_region
      %s153 = ssub.s32 128, 128
      %154 = vsyncadd [#allocation3], %s153
      %s156 = sshll.u32 [#allocation2], 4
      %s157 = int_to_ptr.vmem [resolvable:$true] %s156
      %159 = dma.vmem_to_hbm [thread:$0]  %s157, 128, %s3, [#allocation3]
    $region17: #{tpu_custom_call.1} parent=1 // pred_fallthru
      _
    // Predicated region
    $region18: #{tpu_custom_call.1} parent=1 // pred_check
      _
    $region19: #{tpu_custom_call.1} parent=1 // pred_check_branch
      %161 = sbr.rel (0) target = $region21
    $region20: #{tpu_custom_call.1} parent=1 // pred_region
      %162 = dma.done [#allocation3], 128
    $region21: #{tpu_custom_call.1} parent=1 // pred_fallthru
      _
    %163 = vsyncpa [#allocation3], 1

</llo_original>
